<compile_context>
chip_gen: v7x
topology: tpu7x:2x2x1
jax: 0.10.0
libtpu: 0.0.40
codegen_flags: <defaults>
</compile_context>

<pallas_src>
import functools

import numpy as np
import jax
import jax.numpy as jnp
from jax import lax
from jax.experimental import pallas as pl
from jax.experimental.pallas import tpu as pltpu

_LANES = 128


def _round_up(v, m):
    return ((v + m - 1) // m) * m


def _pad2(a, rows, cols):
    pr, pc = rows - a.shape[0], cols - a.shape[1]
    if pr or pc:
        a = jnp.pad(a, ((0, pr), (0, pc)))
    return a


@functools.lru_cache(maxsize=None)
def _vmem_budget():
    """~82% of per-TensorCore VMEM capacity (64 MiB on v7x, 128 MiB on v5e/v6e)."""
    try:
        cap = int(pltpu.get_tpu_info().vmem_capacity_bytes)
    except Exception:
        cap = 64 * 2**20  # conservative fallback (v7x-sized)
    return int(0.82 * cap)


def _pick_tm(n, dim_p):
    """Row tile: multiple of 16 (bf16 sublane packing), larger at small dim,
    and >= 2 row-grid steps when n > 256 (v7x has two TensorCores)."""
    if dim_p <= 512:
        tm_max = 1024
    elif dim_p <= 1024:
        tm_max = 512
    else:
        tm_max = 256
    tm = min(tm_max, _round_up(max(n, 1), 16))
    if n > 256:
        tm = min(tm, max(128, _round_up(pl.cdiv(n, 2), 16)))
    return max(tm, 16)


# ---------------------------------------------------------------------------
# Kernels.
# ---------------------------------------------------------------------------

def _head(h2, w3_row, b3):
    # dim -> 1 head as an MXU contraction over the lane axis of both operands:
    # (1, dim_p) . (tm, dim_p)^T -> (1, tm).  The result is lane-dense so the
    # final store is an unmasked vst rather than a 1-wide masked column.
    out = lax.dot_general(w3_row, h2.astype(jnp.bfloat16),
                          dimension_numbers=(((1,), (1,)), ((), ())),
                          preferred_element_type=jnp.float32)
    return out + b3


def _resident_mid_kernel(x_ref, w1_ref, b1_ref, w2_ref, b2_ref, o_ref):
    """Fused Linear->ReLU->Linear->ReLU; whole weights resident in VMEM."""
    h1 = jnp.dot(x_ref[...], w1_ref[...], preferred_element_type=jnp.float32)
    h1 = jnp.maximum(h1 + b1_ref[...], 0.0)
    h2 = jnp.dot(h1.astype(jnp.bfloat16), w2_ref[...],
                 preferred_element_type=jnp.float32)
    h2 = jnp.maximum(h2 + b2_ref[...], 0.0)
    o_ref[...] = h2.astype(o_ref.dtype)


def _resident_last_kernel(x_ref, w1_ref, b1_ref, w2_ref, b2_ref, w3_ref, b3_ref,
                          o_ref):
    """Fused Linear->ReLU->Linear->ReLU->Linear(dim, 1) (lane-dense head)."""
    h1 = jnp.dot(x_ref[...], w1_ref[...], preferred_element_type=jnp.float32)
    h1 = jnp.maximum(h1 + b1_ref[...], 0.0)
    h2 = jnp.dot(h1.astype(jnp.bfloat16), w2_ref[...],
                 preferred_element_type=jnp.float32)
    h2 = jnp.maximum(h2 + b2_ref[...], 0.0)
    out = _head(h2, w3_ref[...], b3_ref[0, 0])                    # (1, tm)
    o_ref[...] = out.reshape(o_ref.shape).astype(o_ref.dtype)


def _tiled_mid_kernel(x_ref, w1_ref, b1_ref, w2_ref, b2_ref, o_ref, acc_ref):
    """Hidden-dim-tiled variant for large dim: step j processes a th-wide slab
    of the hidden layer and accumulates its contribution to h2 in VMEM."""
    j = pl.program_id(1)

    @pl.when(j == 0)
    def _():
        acc_ref[...] = jnp.zeros_like(acc_ref)

    h1 = jnp.dot(x_ref[...], w1_ref[...], preferred_element_type=jnp.float32)
    h1 = jnp.maximum(h1 + b1_ref[...], 0.0)                        # (tm, th)
    acc_ref[...] += jnp.dot(h1.astype(jnp.bfloat16), w2_ref[...],
                            preferred_element_type=jnp.float32)    # (tm, dim_p)

    @pl.when(j == pl.num_programs(1) - 1)
    def _():
        h2 = jnp.maximum(acc_ref[...] + b2_ref[...], 0.0)
        o_ref[...] = h2.astype(o_ref.dtype)


def _tiled_last_kernel(x_ref, w1_ref, b1_ref, w2_ref, b2_ref, w3_ref, b3_ref,
                       o_ref, acc_ref):
    j = pl.program_id(1)

    @pl.when(j == 0)
    def _():
        acc_ref[...] = jnp.zeros_like(acc_ref)

    h1 = jnp.dot(x_ref[...], w1_ref[...], preferred_element_type=jnp.float32)
    h1 = jnp.maximum(h1 + b1_ref[...], 0.0)
    acc_ref[...] += jnp.dot(h1.astype(jnp.bfloat16), w2_ref[...],
                            preferred_element_type=jnp.float32)

    @pl.when(j == pl.num_programs(1) - 1)
    def _():
        h2 = jnp.maximum(acc_ref[...] + b2_ref[...], 0.0)
        out = _head(h2, w3_ref[...], b3_ref[0, 0])
        o_ref[...] = out.reshape(o_ref.shape).astype(o_ref.dtype)


# ---------------------------------------------------------------------------
# Wrapper.
# ---------------------------------------------------------------------------

def _tiled_need(dim_p, tm, th, x_tile, o_tile):
    return (2 * dim_p * th * 2 + 2 * th * dim_p * 2   # streamed w1/w2 blocks (2 bufs)
            + 2 * x_tile + 2 * o_tile                 # x / out tiles (2 bufs)
            + tm * dim_p * 4                          # f32 accumulator scratch
            + tm * th * 4 + 2 * tm * dim_p * 4        # live f32 intermediates
            + dim_p * 4 + 2 * th * 4                  # b2 (resident) + b1 blocks
            + (2 << 20))                              # compiler scratch margin


@functools.partial(jax.jit, static_argnames=("is_pp_last", "out_dtype", "hidden_tile"))
def mlp_forward(x, params, *, is_pp_last=False, out_dtype=None, hidden_tile=None):
    """x: (N, dim).  params: output of prepare_params() (padded, bf16 weights)."""
    n, dim = x.shape
    dim_p = params["w1"].shape[0]
    assert params["w1"].shape == (dim_p, dim_p) and dim <= dim_p

    if is_pp_last:
        out_dt = np.dtype(x.dtype)   # head output is tiny; keep input dtype
    else:
        out_dt = np.dtype(out_dtype) if out_dtype is not None else np.dtype(x.dtype)

    tm = _pick_tm(n, dim_p)
    n_p = _round_up(n, tm)
    n_grid = n_p // tm
    x_p = _pad2(x, n_p, dim_p).astype(jnp.bfloat16)

    budget = _vmem_budget()
    x_tile = tm * dim_p * 2
    o_tile = tm * out_dt.itemsize if is_pp_last else tm * dim_p * out_dt.itemsize
    w_bytes = (2 * dim_p * dim_p * 2 + 2 * dim_p * 4
               + (dim_p * 2 + 4 if is_pp_last else 0))
    # Weights are single-buffered (Buffered(1)); only x/out tiles are double-buffered.
    resident_need = w_bytes + 2 * x_tile + 2 * o_tile + 3 * tm * dim_p * 4 + (2 << 20)
    use_tiled = (hidden_tile is not None) or (resident_need > budget)

    if not use_tiled:
        need = resident_need
        weight_passes = 1
        grid = (n_grid,)
        dims_sem = ("parallel",)
        scratch = ()
        # NOTE: if a profile shows exposed x-tile DMA at small dim, bump this to
        # pipeline_mode=pl.Buffered(3).
        x_spec = pl.BlockSpec((tm, dim_p), lambda i: (i, 0))
        resident = lambda shape: pl.BlockSpec(shape, lambda i: (0,) * len(shape),
                                              pipeline_mode=pl.Buffered(1))
        if is_pp_last:
            kernel = _resident_last_kernel
            in_specs = [x_spec,
                        resident((dim_p, dim_p)), resident((1, dim_p)),
                        resident((dim_p, dim_p)), resident((1, dim_p)),
                        resident((1, dim_p)),
                        pl.BlockSpec(memory_space=pltpu.MemorySpace.SMEM)]
            out_spec = pl.BlockSpec((1, 1, tm), lambda i: (i, 0, 0))
            out_shape = jax.ShapeDtypeStruct((n_grid, 1, tm), out_dt)
            args = (x_p, params["w1"], params["b1"], params["w2"], params["b2"],
                    params["w3"], params["b3"])
        else:
            kernel = _resident_mid_kernel
            in_specs = [x_spec,
                        resident((dim_p, dim_p)), resident((1, dim_p)),
                        resident((dim_p, dim_p)), resident((1, dim_p))]
            out_spec = pl.BlockSpec((tm, dim_p), lambda i: (i, 0))
            out_shape = jax.ShapeDtypeStruct((n_p, dim_p), out_dt)
            args = (x_p, params["w1"], params["b1"], params["w2"], params["b2"])
    else:
        # Hidden-dim-tiled path: weights streamed per step, f32 accumulator in VMEM.
        if hidden_tile is not None:
            th = int(hidden_tile)
            if th <= 0 or dim_p % th:
                th = _LANES
        else:
            th = None
            for cand in (512, 256, 128):
                if dim_p % cand == 0 and _tiled_need(dim_p, tm, cand, x_tile, o_tile) <= budget:
                    th = cand
                    break
            if th is None:
                # TODO(synk): for very large dim also tile w2's output columns
                # (N axis); a 128-wide hidden tile alone may still exceed v7x VMEM.
                th = _LANES
        need = _tiled_need(dim_p, tm, th, x_tile, o_tile)
        weight_passes = n_grid
        grid = (n_grid, dim_p // th)
        dims_sem = ("parallel", "arbitrary")
        scratch = (pltpu.VMEM((tm, dim_p), jnp.float32),)
        x_spec = pl.BlockSpec((tm, dim_p), lambda i, j: (i, 0))
        w1_spec = pl.BlockSpec((dim_p, th), lambda i, j: (0, j))
        b1_spec = pl.BlockSpec((1, th), lambda i, j: (0, j))
        w2_spec = pl.BlockSpec((th, dim_p), lambda i, j: (j, 0))
        b2_spec = pl.BlockSpec((1, dim_p), lambda i, j: (0, 0),
                               pipeline_mode=pl.Buffered(1))
        if is_pp_last:
            kernel = _tiled_last_kernel
            in_specs = [x_spec, w1_spec, b1_spec, w2_spec, b2_spec,
                        pl.BlockSpec((1, dim_p), lambda i, j: (0, 0),
                                     pipeline_mode=pl.Buffered(1)),
                        pl.BlockSpec(memory_space=pltpu.MemorySpace.SMEM)]
            out_spec = pl.BlockSpec((1, 1, tm), lambda i, j: (i, 0, 0))
            out_shape = jax.ShapeDtypeStruct((n_grid, 1, tm), out_dt)
            args = (x_p, params["w1"], params["b1"], params["w2"], params["b2"],
                    params["w3"], params["b3"])
        else:
            kernel = _tiled_mid_kernel
            in_specs = [x_spec, w1_spec, b1_spec, w2_spec, b2_spec]
            out_spec = pl.BlockSpec((tm, dim_p), lambda i, j: (i, 0))
            out_shape = jax.ShapeDtypeStruct((n_p, dim_p), out_dt)
            args = (x_p, params["w1"], params["b1"], params["w2"], params["b2"])

    vmem_limit = int(min(budget, max(need, 32 * 2**20)))
    flops = 4 * n_p * dim_p * dim_p + (2 * n_p * dim_p if is_pp_last else 0)
    out_hbm = (n_grid * tm * out_dt.itemsize if is_pp_last
               else n_p * dim_p * out_dt.itemsize)
    bytes_accessed = n_p * dim_p * 2 + weight_passes * w_bytes + out_hbm

    out_p = pl.pallas_call(
        kernel,
        out_shape=out_shape,
        grid_spec=pltpu.PrefetchScalarGridSpec(
            num_scalar_prefetch=0,
            grid=grid,
            in_specs=in_specs,
            out_specs=out_spec,
            scratch_shapes=scratch),
        compiler_params=pltpu.CompilerParams(
            dimension_semantics=dims_sem,
            vmem_limit_bytes=vmem_limit),
        cost_estimate=pl.CostEstimate(flops=int(flops), transcendentals=0,
                                      bytes_accessed=int(bytes_accessed)),
    )(*args)

    if is_pp_last:
        return out_p.reshape(n_p, 1)[:n]
    return out_p[:n, :dim]


# ---------------------------------------------------------------------------
# Parameter handling + module-level forward.
# ---------------------------------------------------------------------------

def init_params(key, dim, is_pp_last):
    """Deterministic synthetic parameters (uniform, PyTorch-Linear-like scale),
    stored pre-transposed as (in, out)."""
    ks = jax.random.split(key, 6)
    scale = 1.0 / jnp.sqrt(dim)
    params = {
        "w1": jax.random.uniform(ks[0], (dim, dim), jnp.float32, -scale, scale),
        "b1": jax.random.uniform(ks[1], (1, dim), jnp.float32, -scale, scale),
        "w2": jax.random.uniform(ks[2], (dim, dim), jnp.float32, -scale, scale),
        "b2": jax.random.uniform(ks[3], (1, dim), jnp.float32, -scale, scale),
    }
    if is_pp_last:
        params["w3"] = jax.random.uniform(ks[4], (dim, 1), jnp.float32, -scale, scale)
        params["b3"] = jax.random.uniform(ks[5], (1, 1), jnp.float32, -scale, scale)
    return params


def prepare_params(params, *, is_pp_last=False):
    """One-time weight formatting (pad features to a multiple of 128 lanes and
    cast matmul weights to bf16).  Hoisted out of the per-call path so kernel
    DMAs are the only per-forward weight HBM traffic."""
    dim = params["w1"].shape[0]
    dim_p = _round_up(dim, _LANES)
    prepared = {
        "w1": _pad2(params["w1"], dim_p, dim_p).astype(jnp.bfloat16),
        "b1": _pad2(params["b1"].reshape(1, -1), 1, dim_p).astype(jnp.float32),
        "w2": _pad2(params["w2"], dim_p, dim_p).astype(jnp.bfloat16),
        "b2": _pad2(params["b2"].reshape(1, -1), 1, dim_p).astype(jnp.float32),
    }
    if is_pp_last:
        prepared["w3"] = _pad2(params["w3"].reshape(1, -1), 1, dim_p).astype(jnp.bfloat16)
        prepared["b3"] = params["b3"].reshape(1, 1).astype(jnp.float32)
    return prepared


def mlp_module_forward(x, input_tensor, params, *, is_pp_first, is_pp_last,
                       out_dtype=None, hidden_tile=None):
    """Mirrors MLP.forward: if not is_pp_first, the module ignores `x` and uses
    the tensor previously passed to set_input_tensor()."""
    h = x if is_pp_first else input_tensor
    return mlp_forward(h, params, is_pp_last=is_pp_last,
                       out_dtype=out_dtype, hidden_tile=hidden_tile)


if __name__ == "__main__":
    key = jax.random.PRNGKey(0)
    kx, kp1, kp2, kp3, kx2 = jax.random.split(key, 5)

    def ref(h, p, last):
        h = jnp.maximum(h @ p["w1"] + p["b1"], 0.0)
        h = jnp.maximum(h @ p["w2"] + p["b2"], 0.0)
        if last:
            h = h @ p["w3"] + p["b3"]
        return h

    # Case 1: first+last pipeline stage (uses x directly, has final dim->1 head).
    batch, dim = 8, 32
    x = jax.random.normal(kx, (batch, dim), jnp.float32)
    raw_last = init_params(kp1, dim, is_pp_last=True)
    prep_last = prepare_params(raw_last, is_pp_last=True)
    out_last = mlp_module_forward(x, None, prep_last,
                                  is_pp_first=True, is_pp_last=True)
    jax.block_until_ready(out_last)
    assert out_last.shape == (batch, 1)
    assert jnp.allclose(out_last, ref(x, raw_last, True), atol=3e-2, rtol=3e-2)

    # Case 2: middle stage (not first -> consumes set_input_tensor, no head).
    raw_mid = init_params(kp2, dim, is_pp_last=False)
    prep_mid = prepare_params(raw_mid, is_pp_last=False)
    input_tensor = jax.random.normal(jax.random.PRNGKey(1), (batch, dim), jnp.float32)
    out_mid = mlp_module_forward(x, input_tensor, prep_mid,
                                 is_pp_first=False, is_pp_last=False)
    jax.block_until_ready(out_mid)
    assert out_mid.shape == (batch, dim)
    assert jnp.allclose(out_mid, ref(input_tensor, raw_mid, False),
                        atol=3e-2, rtol=3e-2)

    # Case 3: exercise the large-dim hidden-tiled path (forced at small shapes).
    batch2, dim2 = 64, 256
    x2 = jax.random.normal(kx2, (batch2, dim2), jnp.float32)
    raw_big = init_params(kp3, dim2, is_pp_last=True)
    prep_big = prepare_params(raw_big, is_pp_last=True)
    out_big = mlp_forward(x2, prep_big, is_pp_last=True, hidden_tile=128)
    jax.block_until_ready(out_big)
    assert out_big.shape == (batch2, 1)
    assert jnp.allclose(out_big, ref(x2, raw_big, True), atol=5e-2, rtol=5e-2)

    # Case 4: tiled mid stage with bf16 output (next stage re-casts to bf16 anyway).
    raw_big_mid = init_params(jax.random.PRNGKey(7), dim2, is_pp_last=False)
    prep_big_mid = prepare_params(raw_big_mid, is_pp_last=False)
    out_big_mid = mlp_forward(x2, prep_big_mid, is_pp_last=False,
                              out_dtype=jnp.bfloat16, hidden_tile=128)
    jax.block_until_ready(out_big_mid)
    assert out_big_mid.shape == (batch2, dim2) and out_big_mid.dtype == jnp.bfloat16
    assert jnp.allclose(out_big_mid.astype(jnp.float32),
                        ref(x2, raw_big_mid, False), atol=5e-2, rtol=5e-2)

    print("KERNEL_OK")
</pallas_src>

<mosaic_0001>
module attributes {stable_mosaic.version = 11 : i64} {
  func.func @_resident_last_kernel(%arg0: i32, %arg1: memref<16x128xbf16, #tpu.memory_space<vmem>>, %arg2: memref<128x128xbf16, #tpu.memory_space<vmem>>, %arg3: memref<1x128xf32, #tpu.memory_space<vmem>>, %arg4: memref<128x128xbf16, #tpu.memory_space<vmem>>, %arg5: memref<1x128xf32, #tpu.memory_space<vmem>>, %arg6: memref<1x128xbf16, #tpu.memory_space<vmem>>, %arg7: memref<1x1xf32, #tpu.memory_space<smem>>, %arg8: memref<1x1x16xf32, #tpu.memory_space<vmem>>) attributes {dimension_semantics = [#tpu.dimension_semantics<parallel>], iteration_bounds = array<i64: 1>, scalar_prefetch = 0 : i64, scratch_operands = 0 : i64, tpu.core_type = #tpu.core_type<tc>, window_params = [{transform_indices = @transform_0, window_bounds = array<i64: 16, 128>}, {pipeline_mode = #tpu.pipeline_mode<synchronous>, transform_indices = @transform_1, window_bounds = array<i64: 128, 128>}, {pipeline_mode = #tpu.pipeline_mode<synchronous>, transform_indices = @transform_2, window_bounds = array<i64: 1, 128>}, {pipeline_mode = #tpu.pipeline_mode<synchronous>, transform_indices = @transform_3, window_bounds = array<i64: 128, 128>}, {pipeline_mode = #tpu.pipeline_mode<synchronous>, transform_indices = @transform_4, window_bounds = array<i64: 1, 128>}, {pipeline_mode = #tpu.pipeline_mode<synchronous>, transform_indices = @transform_5, window_bounds = array<i64: 1, 128>}, {transform_indices = @transform_6, window_bounds = array<i64: 1, 1>}, {transform_indices = @transform_7, window_bounds = array<i64: 1, 1, 16>}]} {
    %c0 = arith.constant 0 : index
    %c0_0 = arith.constant 0 : index
    %0 = vector.load %arg1[%c0, %c0_0] : memref<16x128xbf16, #tpu.memory_space<vmem>>, vector<16x128xbf16>
    %c0_1 = arith.constant 0 : index
    %c0_2 = arith.constant 0 : index
    %1 = vector.load %arg2[%c0_1, %c0_2] : memref<128x128xbf16, #tpu.memory_space<vmem>>, vector<128x128xbf16>
    %cst = arith.constant dense<0.000000e+00> : vector<16x128xf32>
    %2 = tpu.matmul %0, %1, %cst {dimension_numbers = #tpu.dot_dimension_numbers<[1], [0], [0], [1], [0, 0, 1, 1], [], []>} : vector<16x128xbf16>, vector<128x128xbf16>, vector<16x128xf32> -> vector<16x128xf32>
    %c0_3 = arith.constant 0 : index
    %c0_4 = arith.constant 0 : index
    %3 = vector.load %arg3[%c0_3, %c0_4] : memref<1x128xf32, #tpu.memory_space<vmem>>, vector<1x128xf32>
    %4 = vector.broadcast %3 : vector<1x128xf32> to vector<16x128xf32>
    %5 = arith.addf %2, %4 : vector<16x128xf32>
    %cst_5 = arith.constant 0.000000e+00 : f32
    %6 = vector.broadcast %cst_5 : f32 to vector<16x128xf32>
    %7 = arith.maximumf %5, %6 : vector<16x128xf32>
    %8 = arith.truncf %7 : vector<16x128xf32> to vector<16x128xbf16>
    %c0_6 = arith.constant 0 : index
    %c0_7 = arith.constant 0 : index
    %9 = vector.load %arg4[%c0_6, %c0_7] : memref<128x128xbf16, #tpu.memory_space<vmem>>, vector<128x128xbf16>
    %cst_8 = arith.constant dense<0.000000e+00> : vector<16x128xf32>
    %10 = tpu.matmul %8, %9, %cst_8 {dimension_numbers = #tpu.dot_dimension_numbers<[1], [0], [0], [1], [0, 0, 1, 1], [], []>} : vector<16x128xbf16>, vector<128x128xbf16>, vector<16x128xf32> -> vector<16x128xf32>
    %c0_9 = arith.constant 0 : index
    %c0_10 = arith.constant 0 : index
    %11 = vector.load %arg5[%c0_9, %c0_10] : memref<1x128xf32, #tpu.memory_space<vmem>>, vector<1x128xf32>
    %12 = vector.broadcast %11 : vector<1x128xf32> to vector<16x128xf32>
    %13 = arith.addf %10, %12 : vector<16x128xf32>
    %cst_11 = arith.constant 0.000000e+00 : f32
    %14 = vector.broadcast %cst_11 : f32 to vector<16x128xf32>
    %15 = arith.maximumf %13, %14 : vector<16x128xf32>
    %c0_12 = arith.constant 0 : index
    %c0_13 = arith.constant 0 : index
    %16 = vector.load %arg6[%c0_12, %c0_13] : memref<1x128xbf16, #tpu.memory_space<vmem>>, vector<1x128xbf16>
    %c0_14 = arith.constant 0 : index
    %c0_15 = arith.constant 0 : index
    %17 = memref.load %arg7[%c0_14, %c0_15] : memref<1x1xf32, #tpu.memory_space<smem>>
    %18 = arith.truncf %15 : vector<16x128xf32> to vector<16x128xbf16>
    %cst_16 = arith.constant dense<0.000000e+00> : vector<1x16xf32>
    %19 = tpu.matmul %16, %18, %cst_16 {dimension_numbers = #tpu.dot_dimension_numbers<[1], [1], [0], [0], [0, 0, 1, 0], [], []>} : vector<1x128xbf16>, vector<16x128xbf16>, vector<1x16xf32> -> vector<1x16xf32>
    %20 = vector.broadcast %17 : f32 to vector<1x16xf32>
    %21 = arith.addf %19, %20 : vector<1x16xf32>
    %22 = vector.shape_cast %21 : vector<1x16xf32> to vector<1x1x16xf32>
    %c0_17 = arith.constant 0 : index
    %c0_18 = arith.constant 0 : index
    %c0_19 = arith.constant 0 : index
    %23 = vector.load %arg8[%c0_17, %c0_18, %c0_19] : memref<1x1x16xf32, #tpu.memory_space<vmem>>, vector<1x1x16xf32>
    tpu.vector_store %arg8[%c0_17, %c0_18, %c0_19], %22 {strides = array<i32>} : memref<1x1x16xf32, #tpu.memory_space<vmem>>, vector<1x1x16xf32>,
    return
  }
  func.func @transform_0(%arg0: i32) -> (i32, i32) {
    %c0_i32 = arith.constant 0 : i32
    %c0_i32_0 = arith.constant 0 : i32
    return %arg0, %c0_i32 : i32, i32
  }
  func.func @transform_1(%arg0: i32) -> (i32, i32) {
    %c0_i32 = arith.constant 0 : i32
    %c0_i32_0 = arith.constant 0 : i32
    %c0_i32_1 = arith.constant 0 : i32
    return %c0_i32, %c0_i32_0 : i32, i32
  }
  func.func @transform_2(%arg0: i32) -> (i32, i32) {
    %c0_i32 = arith.constant 0 : i32
    %c0_i32_0 = arith.constant 0 : i32
    %c0_i32_1 = arith.constant 0 : i32
    return %c0_i32, %c0_i32_0 : i32, i32
  }
  func.func @transform_3(%arg0: i32) -> (i32, i32) {
    %c0_i32 = arith.constant 0 : i32
    %c0_i32_0 = arith.constant 0 : i32
    %c0_i32_1 = arith.constant 0 : i32
    return %c0_i32, %c0_i32_0 : i32, i32
  }
  func.func @transform_4(%arg0: i32) -> (i32, i32) {
    %c0_i32 = arith.constant 0 : i32
    %c0_i32_0 = arith.constant 0 : i32
    %c0_i32_1 = arith.constant 0 : i32
    return %c0_i32, %c0_i32_0 : i32, i32
  }
  func.func @transform_5(%arg0: i32) -> (i32, i32) {
    %c0_i32 = arith.constant 0 : i32
    %c0_i32_0 = arith.constant 0 : i32
    %c0_i32_1 = arith.constant 0 : i32
    return %c0_i32, %c0_i32_0 : i32, i32
  }
  func.func @transform_6(%arg0: i32) -> (i32, i32) {
    %c0_i32 = arith.constant 0 : i32
    %c0_i32_0 = arith.constant 0 : i32
    %c0_i32_1 = arith.constant 0 : i32
    return %c0_i32, %c0_i32_0 : i32, i32
  }
  func.func @transform_7(%arg0: i32) -> (i32, i32, i32) {
    %c0_i32 = arith.constant 0 : i32
    %c0_i32_0 = arith.constant 0 : i32
    %c0_i32_1 = arith.constant 0 : i32
    return %arg0, %c0_i32, %c0_i32_0 : i32, i32, i32
  }
}

</mosaic_0001>

<llo_original>
// kernel: mlp_forward.1
$region0: #{mlp_forward.1}
  #allocation0 [shape = 'u32[]', space=smem, size = 0x4, offset = 0x4, fixed_abs, tag = 'smem constant byte address 0x4 - core index']
  #allocation1 [shape = 'u32[144,128]{1,0:T(1,128)}', space=vmem, size = 0x12000, scoped, tag = 'internal scratch']
  #allocation2 [shape = 'f32[1,1]{1,0:T(1,128)S(6)}', space=smem, size = 0x200, scoped, tag = 'scoped memory for mlp_forward.1']
  %s0 = inlined_call_operand.vmem [shape: bf16[16,128], index: 0, kind: input, shape index: {}]
  %s1 = inlined_call_operand.hbm [shape: bf16[128,128], index: 1, kind: input, shape index: {}]
  %s2 = inlined_call_operand.vmem [shape: f32[1,128], index: 2, kind: input, shape index: {}]
  %s3 = inlined_call_operand.hbm [shape: bf16[128,128], index: 3, kind: input, shape index: {}]
  %s4 = inlined_call_operand.vmem [shape: f32[1,128], index: 4, kind: input, shape index: {}]
  %s5 = inlined_call_operand.vmem [shape: bf16[1,128], index: 5, kind: input, shape index: {}]
  %s6 = inlined_call_operand.<no memory space> [shape: f32[1,1], index: 6, kind: input, shape index: {}]
  %s7 = inlined_call_operand.vmem [shape: f32[1,1,16], index: 7, kind: output, shape index: {}]
  %s8 = sld [smem:[#allocation0]]
  $region46: #{mlp_forward.1} parent=0
    _
  %s10 = ssub.s32 1, %s8
  %s11 = scalar_select 0, %s10, %s8
  %12 = sst [smem:[#allocation2]] %s6
  $region1: #{mlp_forward.1} parent=0
    #allocation3 [shape = 'u8[32768]{0}', space=vmem, size = 0x8000, scoped, tag = 'input window, operand 1, single buffered']
    #allocation4 [shape = 's32[1]{0}', space=sflag, size = 0x4, scoped, tag = 'scoped memory for mlp_forward.1']
    #allocation5 [shape = 'u8[32768]{0}', space=vmem, size = 0x8000, scoped, tag = 'input window, operand 3, single buffered']
    #allocation6 [shape = 's32[1]{0}', space=sflag, size = 0x4, scoped, tag = 'scoped memory for mlp_forward.1']
    %13 = vsyncpa [#allocation4], 0
    %14 = vsyncpa [#allocation6], 0
    // Predicated region
    $region2: #{mlp_forward.1} parent=1 // pred_check
      _
    $region3: #{mlp_forward.1} parent=1 // pred_check_branch
      %16 = sbr.rel (0) target = $region5
    $region4: #{mlp_forward.1} parent=1 // pred_region
      _
    $region5: #{mlp_forward.1} parent=1 // pred_fallthru
      _
    // Predicated region
    $region6: #{mlp_forward.1} parent=1 // pred_check
      _
    $region7: #{mlp_forward.1} parent=1 // pred_check_branch
      %18 = sbr.rel (0) target = $region9
    $region8: #{mlp_forward.1} parent=1 // pred_region
      %s20 = ssub.s32 1024, 1024
      %21 = vsyncadd [#allocation4], %s20
      %s22 = sshll.u32 [#allocation3], 4
      %s23 = int_to_ptr.vmem [resolvable:$true] %s22
      %28 = dma.hbm_to_vmem [thread:$0]  %s1, 1024, %s23, [#allocation4], 64, 64, 4
    $region9: #{mlp_forward.1} parent=1 // pred_fallthru
      _
    // Predicated region
    $region10: #{mlp_forward.1} parent=1 // pred_check
      _
    $region11: #{mlp_forward.1} parent=1 // pred_check_branch
      %30 = sbr.rel (0) target = $region13
    $region12: #{mlp_forward.1} parent=1 // pred_region
      _
    $region13: #{mlp_forward.1} parent=1 // pred_fallthru
      _
    // Predicated region
    $region14: #{mlp_forward.1} parent=1 // pred_check
      _
    $region15: #{mlp_forward.1} parent=1 // pred_check_branch
      %32 = sbr.rel (0) target = $region17
    $region16: #{mlp_forward.1} parent=1 // pred_region
      %s34 = ssub.s32 1024, 1024
      %35 = vsyncadd [#allocation6], %s34
      %s36 = sshll.u32 [#allocation5], 4
      %s37 = int_to_ptr.vmem [resolvable:$true] %s36
      %42 = dma.hbm_to_vmem [thread:$0]  %s3, 1024, %s37, [#allocation6], 64, 64, 4
    $region17: #{mlp_forward.1} parent=1 // pred_fallthru
      _
    // Predicated region
    $region18: #{mlp_forward.1} parent=1 // pred_check
      _
    $region19: #{mlp_forward.1} parent=1 // pred_check_branch
      %44 = sbr.rel (0) target = $region21
    $region20: #{mlp_forward.1} parent=1 // pred_region
      _
    $region21: #{mlp_forward.1} parent=1 // pred_fallthru
      _
    // Predicated region
    $region22: #{mlp_forward.1} parent=1 // pred_check
      _
    $region23: #{mlp_forward.1} parent=1 // pred_check_branch
      %46 = sbr.rel (0) target = $region25
    $region24: #{mlp_forward.1} parent=1 // pred_region
      _
    $region25: #{mlp_forward.1} parent=1 // pred_fallthru
      _
    // Predicated region
    $region26: #{mlp_forward.1} parent=1 // pred_check
      _
    $region27: #{mlp_forward.1} parent=1 // pred_check_branch
      %48 = sbr.rel (0) target = $region29
    $region28: #{mlp_forward.1} parent=1 // pred_region
      _
    $region29: #{mlp_forward.1} parent=1 // pred_fallthru
      _
    // Predicated region
    $region30: #{mlp_forward.1} parent=1 // pred_check
      _
    $region31: #{mlp_forward.1} parent=1 // pred_check_branch
      %50 = sbr.rel (0) target = $region33
    $region32: #{mlp_forward.1} parent=1 // pred_region
      %51 = dma.done [#allocation4], 1024
    $region33: #{mlp_forward.1} parent=1 // pred_fallthru
      _
    // Predicated region
    $region34: #{mlp_forward.1} parent=1 // pred_check
      _
    $region35: #{mlp_forward.1} parent=1 // pred_check_branch
      %53 = sbr.rel (0) target = $region37
    $region36: #{mlp_forward.1} parent=1 // pred_region
      %54 = dma.done [#allocation6], 1024
    $region37: #{mlp_forward.1} parent=1 // pred_fallthru
      _
    %v56 = vld [vmem:[%s0] sm:$0xf]
    %v57 = vld [vmem:[%s0 + $0x4] sm:$0xf]
    %v58 = vld [vmem:[#allocation3] sm:$0xf]
    %v59 = vld [vmem:[#allocation3 + $0x4] sm:$0xf]
    %v60 = vld [vmem:[#allocation3 + $0x8] sm:$0xf]
    %v61 = vld [vmem:[#allocation3 + $0xc] sm:$0xf]
    %v62 = vld [vmem:[#allocation3 + $0x10] sm:$0xf]
    %v63 = vld [vmem:[#allocation3 + $0x14] sm:$0xf]
    %v64 = vld [vmem:[#allocation3 + $0x18] sm:$0xf]
    %v65 = vld [vmem:[#allocation3 + $0x1c] sm:$0xf]
    %v66 = vld [vmem:[#allocation3 + $0x20] sm:$0xf]
    %v67 = vld [vmem:[#allocation3 + $0x24] sm:$0xf]
    %v68 = vld [vmem:[#allocation3 + $0x28] sm:$0xf]
    %v69 = vld [vmem:[#allocation3 + $0x2c] sm:$0xf]
    %v70 = vld [vmem:[#allocation3 + $0x30] sm:$0xf]
    %v71 = vld [vmem:[#allocation3 + $0x34] sm:$0xf]
    %v72 = vld [vmem:[#allocation3 + $0x38] sm:$0xf]
    %v73 = vld [vmem:[#allocation3 + $0x3c] sm:$0xf]
    %v74 = vld [vmem:[%s2] sm:$0x1]
    %v76 = vlaneseq
    %v77 = vshrl.u32 %v76, 7
    %v78 = vsub.s32 0, %v77
    %v79 = vrot.slane %v74, %v78
    %v83 = vunpack.c.l.b16 %v56
    %v84 = vunpack.c.l.b16 %v57
    %v85 = vpack.c.b16 %v84, %v83
    %v103 = vunpack.c.l.b16 %v58
    %v104 = vunpack.c.l.b16 %v59
    %v105 = vunpack.c.l.b16 %v60
    %v106 = vunpack.c.l.b16 %v61
    %v107 = vunpack.c.l.b16 %v62
    %v108 = vunpack.c.l.b16 %v63
    %v109 = vunpack.c.l.b16 %v64
    %v110 = vunpack.c.l.b16 %v65
    %v111 = vunpack.c.l.b16 %v66
    %v112 = vunpack.c.l.b16 %v67
    %v113 = vunpack.c.l.b16 %v68
    %v114 = vunpack.c.l.b16 %v69
    %v115 = vunpack.c.l.b16 %v70
    %v116 = vunpack.c.l.b16 %v71
    %v117 = vunpack.c.l.b16 %v72
    %v118 = vunpack.c.l.b16 %v73
    %v119 = vpack.c.b16 %v104, %v103
    %v120 = vpack.c.b16 %v106, %v105
    %v121 = vpack.c.b16 %v108, %v107
    %v122 = vpack.c.b16 %v110, %v109
    %v123 = vpack.c.b16 %v112, %v111
    %v124 = vpack.c.b16 %v114, %v113
    %v125 = vpack.c.b16 %v116, %v115
    %v126 = vpack.c.b16 %v118, %v117
    %135 = vmatprep.subr.bf16.mxu0 0
    %136 = vmatpush1.bf16.msra.mxu0 %v119
    %137 = vmatprep.subr.bf16.mxu0 0
    %138 = vmatpush1.bf16.msra.mxu0 %v120
    %139 = vmatprep.subr.bf16.mxu0 0
    %140 = vmatpush1.bf16.msra.mxu0 %v121
    %141 = vmatprep.subr.bf16.mxu0 0
    %142 = vmatpush1.bf16.msra.mxu0 %v122
    %143 = vmatprep.subr.bf16.mxu0 0
    %144 = vmatpush1.bf16.msra.mxu0 %v123
    %145 = vmatprep.subr.bf16.mxu0 0
    %146 = vmatpush1.bf16.msra.mxu0 %v124
    %147 = vmatprep.subr.bf16.mxu0 0
    %148 = vmatpush1.bf16.msra.mxu0 %v125
    %149 = vmatprep.subr.bf16.mxu0 0
    %150 = vmatpush1.bf16.msra.mxu0 %v126
    %151 = vmatprep.subr.bf16.mxu0 0
    %152 = vmatpush1.bf16.msra.mxu0 0
    %153 = vmatprep.subr.bf16.mxu0 0
    %154 = vmatpush1.bf16.msra.mxu0 0
    %155 = vmatprep.subr.bf16.mxu0 0
    %156 = vmatpush1.bf16.msra.mxu0 0
    %157 = vmatprep.subr.bf16.mxu0 0
    %158 = vmatpush1.bf16.msra.mxu0 0
    %159 = vmatprep.subr.bf16.mxu0 0
    %160 = vmatpush1.bf16.msra.mxu0 0
    %161 = vmatprep.subr.bf16.mxu0 0
    %162 = vmatpush1.bf16.msra.mxu0 0
    %163 = vmatprep.subr.bf16.mxu0 0
    %164 = vmatpush1.bf16.msra.mxu0 0
    %165 = vmatprep.subr.bf16.mxu0 0
    %166 = vmatpush1.bf16.msra.mxu0 0
    %167 = vmatprep.mubr.bf16.mxu0 0
    %168 = vmatmul.mubr.bf16.gmra.mrb[0].mxu0 %v85
    %v169 = vpop.f32.mrb[0].mxu0
    %v170 = vadd.f32 %v79, %v169
    %v171 = vpop.f32.mrb[0].mxu0
    %v172 = vpop.f32.mrb[0].mxu0
    %v173 = vadd.f32 %v79, %v172
    %v174 = vpop.f32.mrb[0].mxu0
    %175 = vdwg.mxu0
    %v176 = vmax.f32 %v170, 0.0
    %v177 = vmax.f32 %v173, 0.0
    %v178 = vpack.c.bf16 %v177, %v176
    %v179 = vld [vmem:[#allocation5] sm:$0xf]
    %v180 = vld [vmem:[#allocation5 + $0x4] sm:$0xf]
    %v181 = vld [vmem:[#allocation5 + $0x8] sm:$0xf]
    %v182 = vld [vmem:[#allocation5 + $0xc] sm:$0xf]
    %v183 = vld [vmem:[#allocation5 + $0x10] sm:$0xf]
    %v184 = vld [vmem:[#allocation5 + $0x14] sm:$0xf]
    %v185 = vld [vmem:[#allocation5 + $0x18] sm:$0xf]
    %v186 = vld [vmem:[#allocation5 + $0x1c] sm:$0xf]
    %v187 = vld [vmem:[#allocation5 + $0x20] sm:$0xf]
    %v188 = vld [vmem:[#allocation5 + $0x24] sm:$0xf]
    %v189 = vld [vmem:[#allocation5 + $0x28] sm:$0xf]
    %v190 = vld [vmem:[#allocation5 + $0x2c] sm:$0xf]
    %v191 = vld [vmem:[#allocation5 + $0x30] sm:$0xf]
    %v192 = vld [vmem:[#allocation5 + $0x34] sm:$0xf]
    %v193 = vld [vmem:[#allocation5 + $0x38] sm:$0xf]
    %v194 = vld [vmem:[#allocation5 + $0x3c] sm:$0xf]
    %v195 = vld [vmem:[%s4] sm:$0x1]
    %v197 = vlaneseq
    %v198 = vshrl.u32 %v197, 7
    %v199 = vsub.s32 0, %v198
    %v200 = vrot.slane %v195, %v199
    %v218 = vunpack.c.l.b16 %v179
    %v219 = vunpack.c.l.b16 %v180
    %v220 = vunpack.c.l.b16 %v181
    %v221 = vunpack.c.l.b16 %v182
    %v222 = vunpack.c.l.b16 %v183
    %v223 = vunpack.c.l.b16 %v184
    %v224 = vunpack.c.l.b16 %v185
    %v225 = vunpack.c.l.b16 %v186
    %v226 = vunpack.c.l.b16 %v187
    %v227 = vunpack.c.l.b16 %v188
    %v228 = vunpack.c.l.b16 %v189
    %v229 = vunpack.c.l.b16 %v190
    %v230 = vunpack.c.l.b16 %v191
    %v231 = vunpack.c.l.b16 %v192
    %v232 = vunpack.c.l.b16 %v193
    %v233 = vunpack.c.l.b16 %v194
    %v234 = vpack.c.b16 %v219, %v218
    %v235 = vpack.c.b16 %v221, %v220
    %v236 = vpack.c.b16 %v223, %v222
    %v237 = vpack.c.b16 %v225, %v224
    %v238 = vpack.c.b16 %v227, %v226
    %v239 = vpack.c.b16 %v229, %v228
    %v240 = vpack.c.b16 %v231, %v230
    %v241 = vpack.c.b16 %v233, %v232
    %250 = vmatprep.subr.bf16.mxu0 0
    %251 = vmatpush1.bf16.msra.mxu0 %v234
    %252 = vmatprep.subr.bf16.mxu0 0
    %253 = vmatpush1.bf16.msra.mxu0 %v235
    %254 = vmatprep.subr.bf16.mxu0 0
    %255 = vmatpush1.bf16.msra.mxu0 %v236
    %256 = vmatprep.subr.bf16.mxu0 0
    %257 = vmatpush1.bf16.msra.mxu0 %v237
    %258 = vmatprep.subr.bf16.mxu0 0
    %259 = vmatpush1.bf16.msra.mxu0 %v238
    %260 = vmatprep.subr.bf16.mxu0 0
    %261 = vmatpush1.bf16.msra.mxu0 %v239
    %262 = vmatprep.subr.bf16.mxu0 0
    %263 = vmatpush1.bf16.msra.mxu0 %v240
    %264 = vmatprep.subr.bf16.mxu0 0
    %265 = vmatpush1.bf16.msra.mxu0 %v241
    %266 = vmatprep.subr.bf16.mxu0 0
    %267 = vmatpush1.bf16.msra.mxu0 0
    %268 = vmatprep.subr.bf16.mxu0 0
    %269 = vmatpush1.bf16.msra.mxu0 0
    %270 = vmatprep.subr.bf16.mxu0 0
    %271 = vmatpush1.bf16.msra.mxu0 0
    %272 = vmatprep.subr.bf16.mxu0 0
    %273 = vmatpush1.bf16.msra.mxu0 0
    %274 = vmatprep.subr.bf16.mxu0 0
    %275 = vmatpush1.bf16.msra.mxu0 0
    %276 = vmatprep.subr.bf16.mxu0 0
    %277 = vmatpush1.bf16.msra.mxu0 0
    %278 = vmatprep.subr.bf16.mxu0 0
    %279 = vmatpush1.bf16.msra.mxu0 0
    %280 = vmatprep.subr.bf16.mxu0 0
    %281 = vmatpush1.bf16.msra.mxu0 0
    %282 = vmatprep.mubr.bf16.mxu0 0
    %283 = vmatmul.mubr.bf16.gmra.mrb[0].mxu0 %v178
    %v284 = vpop.f32.mrb[0].mxu0
    %v285 = vadd.f32 %v200, %v284
    %v286 = vpop.f32.mrb[0].mxu0
    %v287 = vpop.f32.mrb[0].mxu0
    %v288 = vadd.f32 %v200, %v287
    %v289 = vpop.f32.mrb[0].mxu0
    %290 = vdwg.mxu0
    %v291 = vmax.f32 %v285, 0.0
    %v292 = vmax.f32 %v288, 0.0
    %v293 = vld [vmem:[%s5] sm:$0x1]
    %s294 = sld [smem:[#allocation2]]
    %v295 = vpack.c.bf16 %v292, %v291
    %v296 = vstv %s294
    %297 = vmatprep.subr.bf16.mxu0 0
    %298 = vmatpush1.bf16.xpose.msra.mxu0 %v295
    %299 = vmatprep.subr.bf16.mxu0 0
    %300 = vmatpush1.bf16.xpose.msra.mxu0 0
    %301 = vmatprep.subr.bf16.mxu0 0
    %302 = vmatpush1.bf16.xpose.msra.mxu0 0
    %303 = vmatprep.subr.bf16.mxu0 0
    %304 = vmatpush1.bf16.xpose.msra.mxu0 0
    %305 = vmatprep.subr.bf16.mxu0 0
    %306 = vmatpush1.bf16.xpose.msra.mxu0 0
    %307 = vmatprep.subr.bf16.mxu0 0
    %308 = vmatpush1.bf16.xpose.msra.mxu0 0
    %309 = vmatprep.subr.bf16.mxu0 0
    %310 = vmatpush1.bf16.xpose.msra.mxu0 0
    %311 = vmatprep.subr.bf16.mxu0 0
    %312 = vmatpush1.bf16.xpose.msra.mxu0 0
    %313 = vmatprep.subr.bf16.mxu0 0
    %314 = vmatpush1.bf16.xpose.msra.mxu0 0
    %315 = vmatprep.subr.bf16.mxu0 0
    %316 = vmatpush1.bf16.xpose.msra.mxu0 0
    %317 = vmatprep.subr.bf16.mxu0 0
    %318 = vmatpush1.bf16.xpose.msra.mxu0 0
    %319 = vmatprep.subr.bf16.mxu0 0
    %320 = vmatpush1.bf16.xpose.msra.mxu0 0
    %321 = vmatprep.subr.bf16.mxu0 0
    %322 = vmatpush1.bf16.xpose.msra.mxu0 0
    %323 = vmatprep.subr.bf16.mxu0 0
    %324 = vmatpush1.bf16.xpose.msra.mxu0 0
    %325 = vmatprep.subr.bf16.mxu0 0
    %326 = vmatpush1.bf16.xpose.msra.mxu0 0
    %327 = vmatprep.subr.bf16.mxu0 0
    %328 = vmatpush1.bf16.xpose.msra.mxu0 0
    %329 = vmatprep.mubr.bf16.mxu0 0
    %330 = vmatmul.mubr.bf16.gmra.mrb[0].mxu0 %v293
    %v331 = vpop.f32.mrb[0].mxu0
    %v332 = vadd.f32 %v296, %v331
    %v333 = vpop.f32.mrb[0].mxu0
    %v334 = vpop.f32.mrb[0].mxu0
    %v335 = vpop.f32.mrb[0].mxu0
    %336 = vdwg.mxu0
    %vm337 = vcmask 122880
    %338 = vst.msk [vmem:[%s7] sm:$0x1] %vm337, %v332
    // Predicated region
    $region38: #{mlp_forward.1} parent=1 // pred_check
      _
    $region39: #{mlp_forward.1} parent=1 // pred_check_branch
      %340 = sbr.rel (0) target = $region41
    $region40: #{mlp_forward.1} parent=1 // pred_region
      _
    $region41: #{mlp_forward.1} parent=1 // pred_fallthru
      _
    // Predicated region
    $region42: #{mlp_forward.1} parent=1 // pred_check
      _
    $region43: #{mlp_forward.1} parent=1 // pred_check_branch
      %342 = sbr.rel (0) target = $region45
    $region44: #{mlp_forward.1} parent=1 // pred_region
      _
    $region45: #{mlp_forward.1} parent=1 // pred_fallthru
      _
    %343 = vsyncpa [#allocation4], 1
    %344 = vsyncpa [#allocation6], 1

</llo_original>
